<compile_context>
chip_gen: v6e
topology: v6e:2x2x1
jax: 0.10.0
libtpu: 0.0.40
codegen_flags: <defaults>
</compile_context>

<pallas_src>
import functools
import math

import jax
import jax.numpy as jnp
from jax.experimental import pallas as pl
from jax.experimental.pallas import tpu as pltpu


def _round_up(v, m):
    return (v + m - 1) // m * m


def _vmem_capacity_bytes():
    """Physical per-core VMEM; conservative fallback if the query is unavailable."""
    try:
        return int(pltpu.get_tpu_info().vmem_capacity_bytes)
    except Exception:
        return 64 * 1024 * 1024  # v7x-sized conservative fallback


def feedforward_kernel(x_ref, g_ref, w1a_ref, w1g_ref, b1a_ref, b1g_ref,
                       w2_ref, b2_ref, o_ref, xn_ref, acc_ref, *, dim_logical):
    """One (row-tile, inner-tile) grid step.

    Grid = (M tiles, inner tiles); the inner axis is last ("arbitrary") so for a
    fixed row tile all inner blocks are visited consecutively and acc/xn carry.
    """
    k = pl.program_id(1)

    @pl.when(k == 0)
    def _():
        # --- RMSNorm: F.normalize(x, dim=-1) * sqrt(dim) * gamma  (f32, once per row tile)
        x = x_ref[...].astype(jnp.float32)            # (tm, Dp); padded cols are zero
        gamma = g_ref[...].astype(jnp.float32)        # (1, Dp)
        sq = jnp.sum(x * x, axis=-1, keepdims=True)   # (tm, 1)
        # 1 / max(||x||, 1e-12) == rsqrt(max(||x||^2, 1e-24)); rsqrt runs on the EUP.
        inv = jax.lax.rsqrt(jnp.maximum(sq, jnp.float32(1e-24)))
        xn = x * (inv * jnp.float32(math.sqrt(dim_logical))) * gamma
        xn_ref[...] = xn.astype(jnp.bfloat16)         # MXU-native operand, reused per k
        acc_ref[...] = jnp.zeros_like(acc_ref)

    # --- Linear(dim -> 2*inner) restricted to inner block k, split into SwiGLU halves
    xn_bf = xn_ref[...]
    a = jnp.dot(xn_bf, w1a_ref[...], preferred_element_type=jnp.float32) + b1a_ref[...]
    gate = jnp.dot(xn_bf, w1g_ref[...], preferred_element_type=jnp.float32) + b1g_ref[...]

    # --- SwiGLU: silu(gate) * a  (kept in f32: v5e has no bf16 VPU/EUP)
    s = (gate * jax.nn.sigmoid(gate)) * a             # (tm, ti)

    # --- Partial Linear(inner -> dim): accumulate this inner block's contribution
    acc_ref[...] += jnp.dot(s.astype(jnp.bfloat16), w2_ref[...],
                            preferred_element_type=jnp.float32)

    @pl.when(k == pl.num_programs(1) - 1)
    def _():
        o_ref[...] = (acc_ref[...] + b2_ref[...]).astype(o_ref.dtype)


def prepare_feedforward_params(gamma, w1, b1, w2, b2, *, max_ti=512):
    """One-time prep: lane-dense zero padding + f32->bf16 weight casts.

    Hoisted out of the per-call path so the padded/cast copies are built once,
    not on every forward pass.
    """
    D = int(gamma.shape[0])
    inner = int(w1.shape[1]) // 2
    Dp = _round_up(D, 128)
    Ip = _round_up(inner, 128)
    # Inner tile: largest multiple of 128 <= max_ti that divides Ip, so no ragged
    # inner block ever feeds the accumulator with non-zero-padded garbage.
    ti = 128
    for cand in range(max_ti, 127, -128):
        if Ip % cand == 0:
            ti = cand
            break

    w1a = jnp.zeros((Dp, Ip), jnp.bfloat16).at[:D, :inner].set(w1[:, :inner].astype(jnp.bfloat16))
    w1g = jnp.zeros((Dp, Ip), jnp.bfloat16).at[:D, :inner].set(w1[:, inner:].astype(jnp.bfloat16))
    b1a = jnp.zeros((1, Ip), jnp.float32).at[0, :inner].set(b1[:inner].astype(jnp.float32))
    b1g = jnp.zeros((1, Ip), jnp.float32).at[0, :inner].set(b1[inner:].astype(jnp.float32))
    w2p = jnp.zeros((Ip, Dp), jnp.bfloat16).at[:inner, :D].set(w2.astype(jnp.bfloat16))
    b2p = jnp.zeros((1, Dp), jnp.float32).at[0, :D].set(b2.astype(jnp.float32))
    g2 = jnp.zeros((1, Dp), jnp.float32).at[0, :D].set(gamma.astype(jnp.float32))

    return dict(D=D, inner=inner, Dp=Dp, Ip=Ip, ti=ti,
                gamma=g2, w1a=w1a, w1g=w1g, b1a=b1a, b1g=b1g, w2=w2p, b2=b2p)


def feedforward(x, params, *, tm=None):
    """x: (B, N, D) float32 -> (B, N, D). `params` from prepare_feedforward_params."""
    B, N, D = x.shape
    assert D == params["D"], "params were prepared for a different dim"
    M = B * N
    Dp, Ip, ti, inner = params["Dp"], params["Ip"], params["ti"], params["inner"]

    vmem_cap = _vmem_capacity_bytes()
    # Leave headroom for compiler-internal scratch: ~48 MiB on v7x, ~96 MiB on v5e/v6e.
    vmem_limit = int(max(32 * 1024 * 1024, vmem_cap * 3 // 4))
    if tm is None:
        # Bigger row tiles on 128 MiB parts (v5e/v6e); tighter on v7x (64 MiB).
        tm = 512 if vmem_cap >= (100 * 1024 * 1024) else 256
    # Row tile: multiple of 8, no larger than the (rounded-up) row count.  No forced
    # multi-step split for small M (only v7x has 2 TCs; elsewhere the grid is serial).
    tm = max(8, min(tm, _round_up(M, 8)))
    grid = (pl.cdiv(M, tm), Ip // ti)

    x2 = x.reshape(M, D)
    if Dp != D:  # pad channels only when not already lane-dense
        x2 = jnp.pad(x2, ((0, 0), (0, Dp - D)))

    kernel = functools.partial(feedforward_kernel, dim_logical=D)

    weight_bytes = 2 * (2 * Dp * Ip + Ip * Dp) + 4 * (2 * Ip + 2 * Dp)
    cost = pl.CostEstimate(
        flops=int(6 * M * D * inner),
        transcendentals=int(M * inner + M),
        bytes_accessed=int(2 * M * Dp * 4 + weight_bytes),
    )

    out = pl.pallas_call(
        kernel,
        out_shape=jax.ShapeDtypeStruct((M, Dp), x.dtype),
        grid_spec=pltpu.PrefetchScalarGridSpec(
            num_scalar_prefetch=0,
            grid=grid,
            in_specs=[
                pl.BlockSpec((tm, Dp), lambda i, k: (i, 0)),   # x rows (reused across k)
                pl.BlockSpec((1, Dp), lambda i, k: (0, 0)),    # gamma (tiny, constant)
                pl.BlockSpec((Dp, ti), lambda i, k: (0, k)),   # W1 value half, inner block k
                pl.BlockSpec((Dp, ti), lambda i, k: (0, k)),   # W1 gate half, inner block k
                pl.BlockSpec((1, ti), lambda i, k: (0, k)),    # b1 value half
                pl.BlockSpec((1, ti), lambda i, k: (0, k)),    # b1 gate half
                pl.BlockSpec((ti, Dp), lambda i, k: (k, 0)),   # W2, inner block k
                pl.BlockSpec((1, Dp), lambda i, k: (0, 0)),    # b2 (tiny, constant)
            ],
            out_specs=pl.BlockSpec((tm, Dp), lambda i, k: (i, 0)),
            scratch_shapes=[
                pltpu.VMEM((tm, Dp), jnp.bfloat16),            # normalized rows (reused per k)
                pltpu.VMEM((tm, Dp), jnp.float32),             # second-projection accumulator
            ],
        ),
        compiler_params=pltpu.CompilerParams(
            dimension_semantics=("parallel", "arbitrary"),
            vmem_limit_bytes=vmem_limit,
        ),
        cost_estimate=cost,
    )(x2, params["gamma"], params["w1a"], params["w1g"],
      params["b1a"], params["b1g"], params["w2"], params["b2"])

    return out[:, :D].reshape(B, N, D)


def feedforward_ref(x, gamma, w1, b1, w2, b2):
    """Pure-JAX f32 reference mirroring the PyTorch forward."""
    d = x.shape[-1]
    l2 = jnp.sqrt(jnp.sum(x * x, axis=-1, keepdims=True))
    xn = x / jnp.maximum(l2, 1e-12) * math.sqrt(d) * gamma
    h = xn @ w1 + b1
    inner = w1.shape[1] // 2
    a, gate = h[..., :inner], h[..., inner:]
    s = jax.nn.silu(gate) * a
    return s @ w2 + b2


if __name__ == "__main__":
    # Shapes implied by the module: x is (b, n, dim); mult=4, inner = int(dim*4*2/3).
    B, N, dim = 2, 16, 48
    mult = 4
    inner_dim = int(dim * mult * 2 / 3)   # 128

    key = jax.random.PRNGKey(0)
    kx, k1, kb1, k2, kb2 = jax.random.split(key, 5)

    x = jax.random.normal(kx, (B, N, dim), dtype=jnp.float32)
    gamma = jnp.ones((dim,), dtype=jnp.float32)   # RMSNorm gamma init
    w1 = jax.random.normal(k1, (dim, inner_dim * 2), dtype=jnp.float32) * (1.0 / math.sqrt(dim))
    b1 = jax.random.normal(kb1, (inner_dim * 2,), dtype=jnp.float32) * 0.01
    w2 = jax.random.normal(k2, (inner_dim, dim), dtype=jnp.float32) * (1.0 / math.sqrt(inner_dim))
    b2 = jax.random.normal(kb2, (dim,), dtype=jnp.float32) * 0.01

    params = prepare_feedforward_params(gamma, w1, b1, w2, b2)   # one-time weight prep
    out = feedforward(x, params)
    out = jax.block_until_ready(out)

    ref = feedforward_ref(x, gamma, w1, b1, w2, b2)
    assert out.shape == (B, N, dim)
    # bf16 MXU operands -> looser tolerance than a pure-f32 comparison.
    assert jnp.allclose(out, ref, atol=5e-2, rtol=5e-2), "mismatch vs reference"
    print("KERNEL_OK")
</pallas_src>

<mosaic_0001>
module attributes {stable_mosaic.version = 11 : i64} {
  func.func @feedforward_kernel(%arg0: i32, %arg1: i32, %arg2: memref<32x128xf32, #tpu.memory_space<vmem>>, %arg3: memref<1x128xf32, #tpu.memory_space<vmem>>, %arg4: memref<128x128xbf16, #tpu.memory_space<vmem>>, %arg5: memref<128x128xbf16, #tpu.memory_space<vmem>>, %arg6: memref<1x128xf32, #tpu.memory_space<vmem>>, %arg7: memref<1x128xf32, #tpu.memory_space<vmem>>, %arg8: memref<128x128xbf16, #tpu.memory_space<vmem>>, %arg9: memref<1x128xf32, #tpu.memory_space<vmem>>, %arg10: memref<32x128xf32, #tpu.memory_space<vmem>>, %arg11: memref<32x128xbf16, #tpu.memory_space<vmem>>, %arg12: memref<32x128xf32, #tpu.memory_space<vmem>>) attributes {dimension_semantics = [#tpu.dimension_semantics<parallel>, #tpu.dimension_semantics<arbitrary>], iteration_bounds = array<i64: 1, 1>, scalar_prefetch = 0 : i64, scratch_operands = 2 : i64, tpu.core_type = #tpu.core_type<tc>, window_params = [{transform_indices = @transform_0, window_bounds = array<i64: 32, 128>}, {pipeline_mode = #tpu.pipeline_mode<synchronous>, transform_indices = @transform_1, window_bounds = array<i64: 1, 128>}, {transform_indices = @transform_2, window_bounds = array<i64: 128, 128>}, {transform_indices = @transform_3, window_bounds = array<i64: 128, 128>}, {transform_indices = @transform_4, window_bounds = array<i64: 1, 128>}, {transform_indices = @transform_5, window_bounds = array<i64: 1, 128>}, {transform_indices = @transform_6, window_bounds = array<i64: 128, 128>}, {pipeline_mode = #tpu.pipeline_mode<synchronous>, transform_indices = @transform_7, window_bounds = array<i64: 1, 128>}, {transform_indices = @transform_8, window_bounds = array<i64: 32, 128>}]} {
    %c0_i32 = arith.constant 0 : i32
    %0 = arith.cmpi eq, %arg1, %c0_i32 : i32
    %1 = arith.extui %0 : i1 to i32
    %c0_i32_0 = arith.constant 0 : i32
    %2 = arith.cmpi ne, %1, %c0_i32_0 : i32
    scf.if %2 {
      %c0_21 = arith.constant 0 : index
      %c0_22 = arith.constant 0 : index
      %30 = vector.load %arg2[%c0_21, %c0_22] : memref<32x128xf32, #tpu.memory_space<vmem>>, vector<32x128xf32>
      %c0_23 = arith.constant 0 : index
      %c0_24 = arith.constant 0 : index
      %31 = vector.load %arg3[%c0_23, %c0_24] : memref<1x128xf32, #tpu.memory_space<vmem>>, vector<1x128xf32>
      %32 = arith.mulf %30, %30 : vector<32x128xf32>
      %cst_25 = arith.constant dense<0.000000e+00> : vector<32xf32>
      %33 = vector.multi_reduction <add>, %32, %cst_25 [1] : vector<32x128xf32> to vector<32xf32>
      %34 = vector.shape_cast %33 : vector<32xf32> to vector<32x1xf32>
      %cst_26 = arith.constant 1.000000e-24 : f32
      %35 = vector.broadcast %cst_26 : f32 to vector<32x1xf32>
      %36 = arith.maximumf %34, %35 : vector<32x1xf32>
      %37 = math.rsqrt %36 : vector<32x1xf32>
      %cst_27 = arith.constant 6.92820311 : f32
      %38 = vector.broadcast %cst_27 : f32 to vector<32x1xf32>
      %39 = arith.mulf %37, %38 : vector<32x1xf32>
      %40 = vector.broadcast %39 : vector<32x1xf32> to vector<32x128xf32>
      %41 = arith.mulf %30, %40 : vector<32x128xf32>
      %42 = vector.broadcast %31 : vector<1x128xf32> to vector<32x128xf32>
      %43 = arith.mulf %41, %42 : vector<32x128xf32>
      %44 = arith.truncf %43 : vector<32x128xf32> to vector<32x128xbf16>
      %c0_28 = arith.constant 0 : index
      %c0_29 = arith.constant 0 : index
      %45 = vector.load %arg11[%c0_28, %c0_29] : memref<32x128xbf16, #tpu.memory_space<vmem>>, vector<32x128xbf16>
      tpu.vector_store %arg11[%c0_28, %c0_29], %44 {strides = array<i32>} : memref<32x128xbf16, #tpu.memory_space<vmem>>, vector<32x128xbf16>,
      %cst_30 = arith.constant 0.000000e+00 : f32
      %46 = vector.broadcast %cst_30 : f32 to vector<32x128xf32>
      %c0_31 = arith.constant 0 : index
      %c0_32 = arith.constant 0 : index
      %47 = vector.load %arg12[%c0_31, %c0_32] : memref<32x128xf32, #tpu.memory_space<vmem>>, vector<32x128xf32>
      tpu.vector_store %arg12[%c0_31, %c0_32], %46 {strides = array<i32>} : memref<32x128xf32, #tpu.memory_space<vmem>>, vector<32x128xf32>,
    } else {
    }
    %c0 = arith.constant 0 : index
    %c0_1 = arith.constant 0 : index
    %3 = vector.load %arg11[%c0, %c0_1] : memref<32x128xbf16, #tpu.memory_space<vmem>>, vector<32x128xbf16>
    %c0_2 = arith.constant 0 : index
    %c0_3 = arith.constant 0 : index
    %4 = vector.load %arg4[%c0_2, %c0_3] : memref<128x128xbf16, #tpu.memory_space<vmem>>, vector<128x128xbf16>
    %cst = arith.constant dense<0.000000e+00> : vector<32x128xf32>
    %5 = tpu.matmul %3, %4, %cst {dimension_numbers = #tpu.dot_dimension_numbers<[1], [0], [0], [1], [0, 0, 1, 1], [], []>} : vector<32x128xbf16>, vector<128x128xbf16>, vector<32x128xf32> -> vector<32x128xf32>
    %c0_4 = arith.constant 0 : index
    %c0_5 = arith.constant 0 : index
    %6 = vector.load %arg6[%c0_4, %c0_5] : memref<1x128xf32, #tpu.memory_space<vmem>>, vector<1x128xf32>
    %7 = vector.broadcast %6 : vector<1x128xf32> to vector<32x128xf32>
    %8 = arith.addf %5, %7 : vector<32x128xf32>
    %c0_6 = arith.constant 0 : index
    %c0_7 = arith.constant 0 : index
    %9 = vector.load %arg5[%c0_6, %c0_7] : memref<128x128xbf16, #tpu.memory_space<vmem>>, vector<128x128xbf16>
    %cst_8 = arith.constant dense<0.000000e+00> : vector<32x128xf32>
    %10 = tpu.matmul %3, %9, %cst_8 {dimension_numbers = #tpu.dot_dimension_numbers<[1], [0], [0], [1], [0, 0, 1, 1], [], []>} : vector<32x128xbf16>, vector<128x128xbf16>, vector<32x128xf32> -> vector<32x128xf32>
    %c0_9 = arith.constant 0 : index
    %c0_10 = arith.constant 0 : index
    %11 = vector.load %arg7[%c0_9, %c0_10] : memref<1x128xf32, #tpu.memory_space<vmem>>, vector<1x128xf32>
    %12 = vector.broadcast %11 : vector<1x128xf32> to vector<32x128xf32>
    %13 = arith.addf %10, %12 : vector<32x128xf32>
    %14 = arith.negf %13 : vector<32x128xf32>
    %15 = math.exp %14 : vector<32x128xf32>
    %cst_11 = arith.constant 1.000000e+00 : f32
    %16 = vector.broadcast %cst_11 : f32 to vector<32x128xf32>
    %17 = arith.addf %16, %15 : vector<32x128xf32>
    %18 = arith.divf %16, %17 : vector<32x128xf32>
    %19 = arith.mulf %13, %18 : vector<32x128xf32>
    %20 = arith.mulf %19, %8 : vector<32x128xf32>
    %c0_12 = arith.constant 0 : index
    %c0_13 = arith.constant 0 : index
    %21 = vector.load %arg12[%c0_12, %c0_13] : memref<32x128xf32, #tpu.memory_space<vmem>>, vector<32x128xf32>
    %22 = arith.truncf %20 : vector<32x128xf32> to vector<32x128xbf16>
    %c0_14 = arith.constant 0 : index
    %c0_15 = arith.constant 0 : index
    %23 = vector.load %arg8[%c0_14, %c0_15] : memref<128x128xbf16, #tpu.memory_space<vmem>>, vector<128x128xbf16>
    %cst_16 = arith.constant dense<0.000000e+00> : vector<32x128xf32>
    %24 = tpu.matmul %22, %23, %cst_16 {dimension_numbers = #tpu.dot_dimension_numbers<[1], [0], [0], [1], [0, 0, 1, 1], [], []>} : vector<32x128xbf16>, vector<128x128xbf16>, vector<32x128xf32> -> vector<32x128xf32>
    %25 = arith.addf %21, %24 : vector<32x128xf32>
    %c0_17 = arith.constant 0 : index
    %c0_18 = arith.constant 0 : index
    %26 = vector.load %arg12[%c0_17, %c0_18] : memref<32x128xf32, #tpu.memory_space<vmem>>, vector<32x128xf32>
    tpu.vector_store %arg12[%c0_17, %c0_18], %25 {strides = array<i32>} : memref<32x128xf32, #tpu.memory_space<vmem>>, vector<32x128xf32>,
    %c0_i32_19 = arith.constant 0 : i32
    %27 = arith.cmpi eq, %arg1, %c0_i32_19 : i32
    %28 = arith.extui %27 : i1 to i32
    %c0_i32_20 = arith.constant 0 : i32
    %29 = arith.cmpi ne, %28, %c0_i32_20 : i32
    scf.if %29 {
      %c0_21 = arith.constant 0 : index
      %c0_22 = arith.constant 0 : index
      %30 = vector.load %arg12[%c0_21, %c0_22] : memref<32x128xf32, #tpu.memory_space<vmem>>, vector<32x128xf32>
      %c0_23 = arith.constant 0 : index
      %c0_24 = arith.constant 0 : index
      %31 = vector.load %arg9[%c0_23, %c0_24] : memref<1x128xf32, #tpu.memory_space<vmem>>, vector<1x128xf32>
      %32 = vector.broadcast %31 : vector<1x128xf32> to vector<32x128xf32>
      %33 = arith.addf %30, %32 : vector<32x128xf32>
      %c0_25 = arith.constant 0 : index
      %c0_26 = arith.constant 0 : index
      %34 = vector.load %arg10[%c0_25, %c0_26] : memref<32x128xf32, #tpu.memory_space<vmem>>, vector<32x128xf32>
      tpu.vector_store %arg10[%c0_25, %c0_26], %33 {strides = array<i32>} : memref<32x128xf32, #tpu.memory_space<vmem>>, vector<32x128xf32>,
    } else {
    }
    return
  }
  func.func @transform_0(%arg0: i32, %arg1: i32) -> (i32, i32) {
    %c0_i32 = arith.constant 0 : i32
    %c0_i32_0 = arith.constant 0 : i32
    return %arg0, %c0_i32 : i32, i32
  }
  func.func @transform_1(%arg0: i32, %arg1: i32) -> (i32, i32) {
    %c0_i32 = arith.constant 0 : i32
    %c0_i32_0 = arith.constant 0 : i32
    %c0_i32_1 = arith.constant 0 : i32
    return %c0_i32, %c0_i32_0 : i32, i32
  }
  func.func @transform_2(%arg0: i32, %arg1: i32) -> (i32, i32) {
    %c0_i32 = arith.constant 0 : i32
    %c0_i32_0 = arith.constant 0 : i32
    return %c0_i32, %arg1 : i32, i32
  }
  func.func @transform_3(%arg0: i32, %arg1: i32) -> (i32, i32) {
    %c0_i32 = arith.constant 0 : i32
    %c0_i32_0 = arith.constant 0 : i32
    return %c0_i32, %arg1 : i32, i32
  }
  func.func @transform_4(%arg0: i32, %arg1: i32) -> (i32, i32) {
    %c0_i32 = arith.constant 0 : i32
    %c0_i32_0 = arith.constant 0 : i32
    return %c0_i32, %arg1 : i32, i32
  }
  func.func @transform_5(%arg0: i32, %arg1: i32) -> (i32, i32) {
    %c0_i32 = arith.constant 0 : i32
    %c0_i32_0 = arith.constant 0 : i32
    return %c0_i32, %arg1 : i32, i32
  }
  func.func @transform_6(%arg0: i32, %arg1: i32) -> (i32, i32) {
    %c0_i32 = arith.constant 0 : i32
    %c0_i32_0 = arith.constant 0 : i32
    return %arg1, %c0_i32 : i32, i32
  }
  func.func @transform_7(%arg0: i32, %arg1: i32) -> (i32, i32) {
    %c0_i32 = arith.constant 0 : i32
    %c0_i32_0 = arith.constant 0 : i32
    %c0_i32_1 = arith.constant 0 : i32
    return %c0_i32, %c0_i32_0 : i32, i32
  }
  func.func @transform_8(%arg0: i32, %arg1: i32) -> (i32, i32) {
    %c0_i32 = arith.constant 0 : i32
    %c0_i32_0 = arith.constant 0 : i32
    return %arg0, %c0_i32 : i32, i32
  }
}

</mosaic_0001>

<llo_original>
// kernel: tpu_custom_call.1
$region0: #{tpu_custom_call.1}
  #allocation0 [shape = 'u32[]', space=smem, size = 0x4, offset = 0x4, fixed_abs, tag = 'smem constant byte address 0x4 - core index']
  #allocation1 [shape = 'u32[144,128]{1,0:T(1,128)}', space=vmem, size = 0x12000, scoped, tag = 'internal scratch']
  #allocation2 [shape = 'bf16[32,128]{1,0:T(8,128)(2,1)}', space=vmem, size = 0x2000, scoped, tag = 'scratch operand']
  #allocation3 [shape = 'f32[32,128]{1,0:T(8,128)}', space=vmem, size = 0x4000, scoped, tag = 'scratch operand']
  %s0 = inlined_call_operand.hbm [shape: f32[32,128], index: 0, kind: input, shape index: {}]
  %s1 = inlined_call_operand.vmem [shape: f32[1,128], index: 1, kind: input, shape index: {}]
  %s2 = inlined_call_operand.hbm [shape: bf16[128,128], index: 2, kind: input, shape index: {}]
  %s3 = inlined_call_operand.hbm [shape: bf16[128,128], index: 3, kind: input, shape index: {}]
  %s4 = inlined_call_operand.vmem [shape: f32[1,128], index: 4, kind: input, shape index: {}]
  %s5 = inlined_call_operand.vmem [shape: f32[1,128], index: 5, kind: input, shape index: {}]
  %s6 = inlined_call_operand.hbm [shape: bf16[128,128], index: 6, kind: input, shape index: {}]
  %s7 = inlined_call_operand.vmem [shape: f32[1,128], index: 7, kind: input, shape index: {}]
  %s8 = inlined_call_operand.hbm [shape: f32[32,128], index: 8, kind: output, shape index: {}]
  %s9 = sld [smem:[#allocation0]]
  $region66: #{tpu_custom_call.1} parent=0
    _
  %s11 = ssub.s32 1, %s9
  %s12 = scalar_select 0, %s11, %s9
  $region1: #{tpu_custom_call.1} parent=0
    #allocation4 [shape = 'u8[16384]{0}', space=vmem, size = 0x4000, scoped, tag = 'input window, operand 0, single buffered']
    #allocation5 [shape = 's32[1]{0}', space=sflag, size = 0x4, scoped, tag = 'scoped memory for tpu_custom_call.1']
    #allocation6 [shape = 's32[1]{0}', space=sflag, size = 0x4, scoped, tag = 'scoped memory for tpu_custom_call.1']
    #allocation7 [shape = 'u8[32768]{0}', space=vmem, size = 0x8000, scoped, tag = 'input window, operand 2, single buffered']
    #allocation8 [shape = 's32[1]{0}', space=sflag, size = 0x4, scoped, tag = 'scoped memory for tpu_custom_call.1']
    #allocation9 [shape = 'u8[32768]{0}', space=vmem, size = 0x8000, scoped, tag = 'input window, operand 3, single buffered']
    #allocation10 [shape = 'u8[32768]{0}', space=vmem, size = 0x8000, scoped, tag = 'input window, operand 6, single buffered']
    #allocation11 [shape = 's32[1]{0}', space=sflag, size = 0x4, scoped, tag = 'scoped memory for tpu_custom_call.1']
    #allocation12 [shape = 'u8[16384]{0}', space=vmem, size = 0x4000, scoped, tag = 'output window, operand 0, single buffered']
    %13 = vsyncpa [#allocation5], 0
    %14 = vsyncpa [#allocation8], 0
    %15 = vsyncpa [#allocation11], 0
    %16 = vsyncpa [#allocation6], 0
    // Predicated region
    $region2: #{tpu_custom_call.1} parent=1 // pred_check
      _
    $region3: #{tpu_custom_call.1} parent=1 // pred_check_branch
      %18 = sbr.rel (0) target = $region5
    $region4: #{tpu_custom_call.1} parent=1 // pred_region
      %s20 = ssub.s32 512, 512
      %21 = vsyncadd [#allocation5], %s20
      %s22 = sshll.u32 [#allocation4], 4
      %s23 = int_to_ptr.vmem [resolvable:$true] %s22
      %28 = dma.hbm_to_vmem [thread:$0]  %s0, 512, %s23, [#allocation5], 128, 128, 8
    $region5: #{tpu_custom_call.1} parent=1 // pred_fallthru
      _
    // Predicated region
    $region6: #{tpu_custom_call.1} parent=1 // pred_check
      _
    $region7: #{tpu_custom_call.1} parent=1 // pred_check_branch
      %30 = sbr.rel (0) target = $region9
    $region8: #{tpu_custom_call.1} parent=1 // pred_region
      _
    $region9: #{tpu_custom_call.1} parent=1 // pred_fallthru
      _
    // Predicated region
    $region10: #{tpu_custom_call.1} parent=1 // pred_check
      _
    $region11: #{tpu_custom_call.1} parent=1 // pred_check_branch
      %32 = sbr.rel (0) target = $region13
    $region12: #{tpu_custom_call.1} parent=1 // pred_region
      %s34 = ssub.s32 1024, 1024
      %35 = vsyncadd [#allocation8], %s34
      %s36 = sshll.u32 [#allocation7], 4
      %s37 = int_to_ptr.vmem [resolvable:$true] %s36
      %42 = dma.hbm_to_vmem [thread:$0]  %s2, 1024, %s37, [#allocation8], 64, 64, 4
    $region13: #{tpu_custom_call.1} parent=1 // pred_fallthru
      _
    // Predicated region
    $region14: #{tpu_custom_call.1} parent=1 // pred_check
      _
    $region15: #{tpu_custom_call.1} parent=1 // pred_check_branch
      %44 = sbr.rel (0) target = $region17
    $region16: #{tpu_custom_call.1} parent=1 // pred_region
      %s46 = ssub.s32 1024, 1024
      %47 = vsyncadd [#allocation8], %s46
      %s48 = sshll.u32 [#allocation9], 4
      %s49 = int_to_ptr.vmem [resolvable:$true] %s48
      %54 = dma.hbm_to_vmem [thread:$0]  %s3, 1024, %s49, [#allocation8], 64, 64, 4
    $region17: #{tpu_custom_call.1} parent=1 // pred_fallthru
      _
    // Predicated region
    $region18: #{tpu_custom_call.1} parent=1 // pred_check
      _
    $region19: #{tpu_custom_call.1} parent=1 // pred_check_branch
      %56 = sbr.rel (0) target = $region21
    $region20: #{tpu_custom_call.1} parent=1 // pred_region
      _
    $region21: #{tpu_custom_call.1} parent=1 // pred_fallthru
      _
    // Predicated region
    $region22: #{tpu_custom_call.1} parent=1 // pred_check
      _
    $region23: #{tpu_custom_call.1} parent=1 // pred_check_branch
      %58 = sbr.rel (0) target = $region25
    $region24: #{tpu_custom_call.1} parent=1 // pred_region
      _
    $region25: #{tpu_custom_call.1} parent=1 // pred_fallthru
      _
    // Predicated region
    $region26: #{tpu_custom_call.1} parent=1 // pred_check
      _
    $region27: #{tpu_custom_call.1} parent=1 // pred_check_branch
      %60 = sbr.rel (0) target = $region29
    $region28: #{tpu_custom_call.1} parent=1 // pred_region
      %s62 = ssub.s32 1024, 1024
      %63 = vsyncadd [#allocation11], %s62
      %s64 = sshll.u32 [#allocation10], 4
      %s65 = int_to_ptr.vmem [resolvable:$true] %s64
      %70 = dma.hbm_to_vmem [thread:$0]  %s6, 1024, %s65, [#allocation11], 64, 64, 4
    $region29: #{tpu_custom_call.1} parent=1 // pred_fallthru
      _
    // Predicated region
    $region30: #{tpu_custom_call.1} parent=1 // pred_check
      _
    $region31: #{tpu_custom_call.1} parent=1 // pred_check_branch
      %72 = sbr.rel (0) target = $region33
    $region32: #{tpu_custom_call.1} parent=1 // pred_region
      _
    $region33: #{tpu_custom_call.1} parent=1 // pred_fallthru
      _
    // Predicated region
    $region34: #{tpu_custom_call.1} parent=1 // pred_check
      _
    $region35: #{tpu_custom_call.1} parent=1 // pred_check_branch
      %74 = sbr.rel (0) target = $region37
    $region36: #{tpu_custom_call.1} parent=1 // pred_region
      %75 = dma.done [#allocation5], 512
    $region37: #{tpu_custom_call.1} parent=1 // pred_fallthru
      _
    // Predicated region
    $region38: #{tpu_custom_call.1} parent=1 // pred_check
      _
    $region39: #{tpu_custom_call.1} parent=1 // pred_check_branch
      %77 = sbr.rel (0) target = $region41
    $region40: #{tpu_custom_call.1} parent=1 // pred_region
      %78 = dma.done [#allocation8], 1024
    $region41: #{tpu_custom_call.1} parent=1 // pred_fallthru
      _
    // Predicated region
    $region42: #{tpu_custom_call.1} parent=1 // pred_check
      _
    $region43: #{tpu_custom_call.1} parent=1 // pred_check_branch
      %80 = sbr.rel (0) target = $region45
    $region44: #{tpu_custom_call.1} parent=1 // pred_region
      %81 = dma.done [#allocation8], 1024
    $region45: #{tpu_custom_call.1} parent=1 // pred_fallthru
      _
    // Predicated region
    $region46: #{tpu_custom_call.1} parent=1 // pred_check
      _
    $region47: #{tpu_custom_call.1} parent=1 // pred_check_branch
      %83 = sbr.rel (0) target = $region49
    $region48: #{tpu_custom_call.1} parent=1 // pred_region
      %84 = dma.done [#allocation11], 1024
    $region49: #{tpu_custom_call.1} parent=1 // pred_fallthru
      _
    %p86 = scmp.eq.s32.totalorder 0, 0
    // Predicated region
    $region50: #{tpu_custom_call.1} parent=1 // pred_check
      %p87 = pneg %p86
    $region51: #{tpu_custom_call.1} parent=1 // pred_check_branch
      %89 = sbr.rel (%p87) target = $region53
    $region52: #{tpu_custom_call.1} parent=1 // pred_region
      %v90 = vld [vmem:[#allocation4] sm:$0xff]
      %v91 = vld [vmem:[#allocation4 + $0x8] sm:$0xff]
      %v92 = vld [vmem:[#allocation4 + $0x10] sm:$0xff]
      %v93 = vld [vmem:[#allocation4 + $0x18] sm:$0xff]
      %v94 = vld [vmem:[%s1] sm:$0x1]
      %v95 = vmul.f32 %v90, %v90
      %v96 = vmul.f32 %v91, %v91
      %v97 = vmul.f32 %v92, %v92
      %v98 = vmul.f32 %v93, %v93
      %99 = vadd.xlane.f32.xlu0 %v95
      %v100 = vpop.xlane.xlu0 %99
      %101 = vadd.xlane.f32.xlu0 %v96
      %v102 = vpop.xlane.xlu0 %101
      %103 = vadd.xlane.f32.xlu0 %v97
      %v104 = vpop.xlane.xlu0 %103
      %105 = vadd.xlane.f32.xlu0 %v98
      %v106 = vpop.xlane.xlu0 %105
      %v107 = vmax.f32 %v100, 1e-24
      %v108 = vmax.f32 %v102, 1e-24
      %v109 = vmax.f32 %v104, 1e-24
      %v110 = vmax.f32 %v106, 1e-24
      %v111 = vrsqrt.pop %v107
      %v112 = vrsqrt.pop %v108
      %v113 = vrsqrt.pop %v109
      %v114 = vrsqrt.pop %v110
      %v115 = vmul.f32 %v111, 6.928203
      %v116 = vmul.f32 %v112, 6.928203
      %v117 = vmul.f32 %v113, 6.928203
      %v118 = vmul.f32 %v114, 6.928203
      %v119 = vmul.f32 %v90, %v115
      %v120 = vmul.f32 %v91, %v116
      %v121 = vmul.f32 %v92, %v117
      %v122 = vmul.f32 %v93, %v118
      %v124 = vlaneseq
      %v125 = vshrl.u32 %v124, 7
      %v126 = vsub.s32 0, %v125
      %v127 = vrot.slane %v94, %v126
      %v129 = vmul.f32 %v119, %v127
      %v130 = vmul.f32 %v120, %v127
      %v131 = vmul.f32 %v121, %v127
      %v132 = vmul.f32 %v122, %v127
      %v133 = vpack.c.bf16 %v130, %v129
      %v134 = vpack.c.bf16 %v132, %v131
      %v137 = vunpack.c.l.b16 %v133
      %v138 = vunpack.c.h.b16 %v133
      %v139 = vunpack.c.l.b16 %v134
      %v140 = vunpack.c.h.b16 %v134
      %v141 = vpack.c.b16 %v137, %v137
      %v142 = vpack.c.b16 %v138, %v138
      %v143 = vpack.c.b16 %v139, %v139
      %v144 = vpack.c.b16 %v140, %v140
      %149 = vst [vmem:[#allocation2] sm:$0xf] %v141
      %150 = vst [vmem:[#allocation2 + $0x4] sm:$0xf] %v142
      %151 = vst [vmem:[#allocation2 + $0x8] sm:$0xf] %v143
      %152 = vst [vmem:[#allocation2 + $0xc] sm:$0xf] %v144
      %153 = vst [vmem:[#allocation3] sm:$0xff] 0.0
      %154 = vst [vmem:[#allocation3 + $0x8] sm:$0xff] 0.0
      %155 = vst [vmem:[#allocation3 + $0x10] sm:$0xff] 0.0
      %156 = vst [vmem:[#allocation3 + $0x18] sm:$0xff] 0.0
    $region53: #{tpu_custom_call.1} parent=1 // pred_fallthru
      _
    %v157 = vld [vmem:[#allocation2] sm:$0xf]
    %v158 = vld [vmem:[#allocation2 + $0x4] sm:$0xf]
    %v159 = vld [vmem:[#allocation2 + $0x8] sm:$0xf]
    %v160 = vld [vmem:[#allocation2 + $0xc] sm:$0xf]
    %v161 = vld [vmem:[#allocation7] sm:$0xf]
    %v162 = vld [vmem:[#allocation7 + $0x4] sm:$0xf]
    %v163 = vld [vmem:[#allocation7 + $0x8] sm:$0xf]
    %v164 = vld [vmem:[#allocation7 + $0xc] sm:$0xf]
    %v165 = vld [vmem:[#allocation7 + $0x10] sm:$0xf]
    %v166 = vld [vmem:[#allocation7 + $0x14] sm:$0xf]
    %v167 = vld [vmem:[#allocation7 + $0x18] sm:$0xf]
    %v168 = vld [vmem:[#allocation7 + $0x1c] sm:$0xf]
    %v169 = vld [vmem:[#allocation7 + $0x20] sm:$0xf]
    %v170 = vld [vmem:[#allocation7 + $0x24] sm:$0xf]
    %v171 = vld [vmem:[#allocation7 + $0x28] sm:$0xf]
    %v172 = vld [vmem:[#allocation7 + $0x2c] sm:$0xf]
    %v173 = vld [vmem:[#allocation7 + $0x30] sm:$0xf]
    %v174 = vld [vmem:[#allocation7 + $0x34] sm:$0xf]
    %v175 = vld [vmem:[#allocation7 + $0x38] sm:$0xf]
    %v176 = vld [vmem:[#allocation7 + $0x3c] sm:$0xf]
    %v177 = vld [vmem:[%s4] sm:$0x1]
    %v179 = vlaneseq
    %v180 = vshrl.u32 %v179, 7
    %v181 = vsub.s32 0, %v180
    %v182 = vrot.slane %v177, %v181
    %v188 = vunpack.c.l.b16 %v157
    %v189 = vunpack.c.l.b16 %v158
    %v190 = vunpack.c.l.b16 %v159
    %v191 = vunpack.c.l.b16 %v160
    %v192 = vpack.c.b16 %v189, %v188
    %v193 = vpack.c.b16 %v191, %v190
    %v212 = vunpack.c.l.b16 %v161
    %v213 = vunpack.c.l.b16 %v162
    %v214 = vunpack.c.l.b16 %v163
    %v215 = vunpack.c.l.b16 %v164
    %v216 = vunpack.c.l.b16 %v165
    %v217 = vunpack.c.l.b16 %v166
    %v218 = vunpack.c.l.b16 %v167
    %v219 = vunpack.c.l.b16 %v168
    %v220 = vunpack.c.l.b16 %v169
    %v221 = vunpack.c.l.b16 %v170
    %v222 = vunpack.c.l.b16 %v171
    %v223 = vunpack.c.l.b16 %v172
    %v224 = vunpack.c.l.b16 %v173
    %v225 = vunpack.c.l.b16 %v174
    %v226 = vunpack.c.l.b16 %v175
    %v227 = vunpack.c.l.b16 %v176
    %v228 = vpack.c.b16 %v213, %v212
    %v229 = vpack.c.b16 %v215, %v214
    %v230 = vpack.c.b16 %v217, %v216
    %v231 = vpack.c.b16 %v219, %v218
    %v232 = vpack.c.b16 %v221, %v220
    %v233 = vpack.c.b16 %v223, %v222
    %v234 = vpack.c.b16 %v225, %v224
    %v235 = vpack.c.b16 %v227, %v226
    %244 = vmatprep.subr.bf16.mxu0 0
    %245 = vmatpush1.bf16.msra.mxu0 %v235
    %246 = vmatprep.subr.bf16.mxu0 0
    %247 = vmatpush1.bf16.msra.mxu0 %v234
    %248 = vmatprep.subr.bf16.mxu0 0
    %249 = vmatpush1.bf16.msra.mxu0 %v233
    %250 = vmatprep.subr.bf16.mxu0 0
    %251 = vmatpush1.bf16.msra.mxu0 %v232
    %252 = vmatprep.subr.bf16.mxu0 0
    %253 = vmatpush1.bf16.msra.mxu0 %v231
    %254 = vmatprep.subr.bf16.mxu0 0
    %255 = vmatpush1.bf16.msra.mxu0 %v230
    %256 = vmatprep.subr.bf16.mxu0 0
    %257 = vmatpush1.bf16.msra.mxu0 %v229
    %258 = vmatprep.subr.bf16.mxu0 0
    %259 = vmatpush1.bf16.msra.mxu0 %v228
    %260 = vmatprep.subr.bf16.mxu0 0
    %261 = vmatpush2.bf16.msra.mxu0 0
    %262 = vmatprep.subr.bf16.mxu0 0
    %263 = vmatpush2.bf16.msra.mxu0 0
    %264 = vmatprep.subr.bf16.mxu0 0
    %265 = vmatpush2.bf16.msra.mxu0 0
    %266 = vmatprep.subr.bf16.mxu0 0
    %267 = vmatpush2.bf16.msra.mxu0 0
    %268 = vmatprep.subr.bf16.mxu0 0
    %269 = vmatpush2.bf16.msra.mxu0 0
    %270 = vmatprep.subr.bf16.mxu0 0
    %271 = vmatpush2.bf16.msra.mxu0 0
    %272 = vmatprep.subr.bf16.mxu0 0
    %273 = vmatpush2.bf16.msra.mxu0 0
    %274 = vmatprep.subr.bf16.mxu0 0
    %275 = vmatpush2.bf16.msra.mxu0 0
    %276 = vmatprep.mubr.bf16.mxu0 0
    %277 = vmatmul.mubr.bf16.gmra.mxu0 %v192
    %v278 = vpop.f32.mrf.mxu0
    %v279 = vadd.f32 %v182, %v278
    %v280 = vpop.f32.mrf.mxu0
    %v281 = vpop.f32.mrf.mxu0
    %v282 = vadd.f32 %v182, %v281
    %v283 = vpop.f32.mrf.mxu0
    %284 = vmatprep.mubr.bf16.mxu0 0
    %285 = vmatmul.mubr.bf16.gmra.mxu0 %v193
    %v286 = vpop.f32.mrf.mxu0
    %v287 = vadd.f32 %v182, %v286
    %v288 = vpop.f32.mrf.mxu0
    %v289 = vpop.f32.mrf.mxu0
    %v290 = vadd.f32 %v182, %v289
    %v291 = vpop.f32.mrf.mxu0
    %292 = vdwg.mxu0
    %v293 = vld [vmem:[#allocation9] sm:$0xf]
    %v294 = vld [vmem:[#allocation9 + $0x4] sm:$0xf]
    %v295 = vld [vmem:[#allocation9 + $0x8] sm:$0xf]
    %v296 = vld [vmem:[#allocation9 + $0xc] sm:$0xf]
    %v297 = vld [vmem:[#allocation9 + $0x10] sm:$0xf]
    %v298 = vld [vmem:[#allocation9 + $0x14] sm:$0xf]
    %v299 = vld [vmem:[#allocation9 + $0x18] sm:$0xf]
    %v300 = vld [vmem:[#allocation9 + $0x1c] sm:$0xf]
    %v301 = vld [vmem:[#allocation9 + $0x20] sm:$0xf]
    %v302 = vld [vmem:[#allocation9 + $0x24] sm:$0xf]
    %v303 = vld [vmem:[#allocation9 + $0x28] sm:$0xf]
    %v304 = vld [vmem:[#allocation9 + $0x2c] sm:$0xf]
    %v305 = vld [vmem:[#allocation9 + $0x30] sm:$0xf]
    %v306 = vld [vmem:[#allocation9 + $0x34] sm:$0xf]
    %v307 = vld [vmem:[#allocation9 + $0x38] sm:$0xf]
    %v308 = vld [vmem:[#allocation9 + $0x3c] sm:$0xf]
    %v309 = vld [vmem:[%s5] sm:$0x1]
    %v311 = vlaneseq
    %v312 = vshrl.u32 %v311, 7
    %v313 = vsub.s32 0, %v312
    %v314 = vrot.slane %v309, %v313
    %v332 = vunpack.c.l.b16 %v293
    %v333 = vunpack.c.l.b16 %v294
    %v334 = vunpack.c.l.b16 %v295
    %v335 = vunpack.c.l.b16 %v296
    %v336 = vunpack.c.l.b16 %v297
    %v337 = vunpack.c.l.b16 %v298
    %v338 = vunpack.c.l.b16 %v299
    %v339 = vunpack.c.l.b16 %v300
    %v340 = vunpack.c.l.b16 %v301
    %v341 = vunpack.c.l.b16 %v302
    %v342 = vunpack.c.l.b16 %v303
    %v343 = vunpack.c.l.b16 %v304
    %v344 = vunpack.c.l.b16 %v305
    %v345 = vunpack.c.l.b16 %v306
    %v346 = vunpack.c.l.b16 %v307
    %v347 = vunpack.c.l.b16 %v308
    %v348 = vpack.c.b16 %v333, %v332
    %v349 = vpack.c.b16 %v335, %v334
    %v350 = vpack.c.b16 %v337, %v336
    %v351 = vpack.c.b16 %v339, %v338
    %v352 = vpack.c.b16 %v341, %v340
    %v353 = vpack.c.b16 %v343, %v342
    %v354 = vpack.c.b16 %v345, %v344
    %v355 = vpack.c.b16 %v347, %v346
    %364 = vmatprep.subr.bf16.mxu0 0
    %365 = vmatpush1.bf16.msra.mxu0 %v355
    %366 = vmatprep.subr.bf16.mxu0 0
    %367 = vmatpush1.bf16.msra.mxu0 %v354
    %368 = vmatprep.subr.bf16.mxu0 0
    %369 = vmatpush1.bf16.msra.mxu0 %v353
    %370 = vmatprep.subr.bf16.mxu0 0
    %371 = vmatpush1.bf16.msra.mxu0 %v352
    %372 = vmatprep.subr.bf16.mxu0 0
    %373 = vmatpush1.bf16.msra.mxu0 %v351
    %374 = vmatprep.subr.bf16.mxu0 0
    %375 = vmatpush1.bf16.msra.mxu0 %v350
    %376 = vmatprep.subr.bf16.mxu0 0
    %377 = vmatpush1.bf16.msra.mxu0 %v349
    %378 = vmatprep.subr.bf16.mxu0 0
    %379 = vmatpush1.bf16.msra.mxu0 %v348
    %380 = vmatprep.subr.bf16.mxu0 0
    %381 = vmatpush2.bf16.msra.mxu0 0
    %382 = vmatprep.subr.bf16.mxu0 0
    %383 = vmatpush2.bf16.msra.mxu0 0
    %384 = vmatprep.subr.bf16.mxu0 0
    %385 = vmatpush2.bf16.msra.mxu0 0
    %386 = vmatprep.subr.bf16.mxu0 0
    %387 = vmatpush2.bf16.msra.mxu0 0
    %388 = vmatprep.subr.bf16.mxu0 0
    %389 = vmatpush2.bf16.msra.mxu0 0
    %390 = vmatprep.subr.bf16.mxu0 0
    %391 = vmatpush2.bf16.msra.mxu0 0
    %392 = vmatprep.subr.bf16.mxu0 0
    %393 = vmatpush2.bf16.msra.mxu0 0
    %394 = vmatprep.subr.bf16.mxu0 0
    %395 = vmatpush2.bf16.msra.mxu0 0
    %396 = vmatprep.mubr.bf16.mxu0 0
    %397 = vmatmul.mubr.bf16.gmra.mxu0 %v192
    %v398 = vpop.f32.mrf.mxu0
    %v399 = vadd.f32 %v314, %v398
    %v400 = vpop.f32.mrf.mxu0
    %v401 = vpop.f32.mrf.mxu0
    %v402 = vadd.f32 %v314, %v401
    %v403 = vpop.f32.mrf.mxu0
    %404 = vmatprep.mubr.bf16.mxu0 0
    %405 = vmatmul.mubr.bf16.gmra.mxu0 %v193
    %v406 = vpop.f32.mrf.mxu0
    %v407 = vadd.f32 %v314, %v406
    %v408 = vpop.f32.mrf.mxu0
    %v409 = vpop.f32.mrf.mxu0
    %v410 = vadd.f32 %v314, %v409
    %v411 = vpop.f32.mrf.mxu0
    %412 = vdwg.mxu0
    %v413 = vxor.u32 %v399, 2147483648
    %v414 = vxor.u32 %v402, 2147483648
    %v415 = vxor.u32 %v407, 2147483648
    %v416 = vxor.u32 %v410, 2147483648
    %v417 = vmul.f32 %v413, 1.442695
    %v418 = vpow.pop %v417
    %v419 = vmul.f32 %v414, 1.442695
    %v420 = vpow.pop %v419
    %v421 = vmul.f32 %v415, 1.442695
    %v422 = vpow.pop %v421
    %v423 = vmul.f32 %v416, 1.442695
    %v424 = vpow.pop %v423
    %v425 = vadd.f32 %v418, 1.0
    %v426 = vadd.f32 %v420, 1.0
    %v427 = vadd.f32 %v422, 1.0
    %v428 = vadd.f32 %v424, 1.0
    %v429 = vrcp.pop %v425
    %v430 = vmul.f32 1.0, %v429
    %v431 = vrcp.pop %v426
    %v432 = vmul.f32 1.0, %v431
    %v433 = vrcp.pop %v427
    %v434 = vmul.f32 1.0, %v433
    %v435 = vrcp.pop %v428
    %v436 = vmul.f32 1.0, %v435
    %v437 = vmul.f32 %v399, %v430
    %v438 = vmul.f32 %v402, %v432
    %v439 = vmul.f32 %v407, %v434
    %v440 = vmul.f32 %v410, %v436
    %v441 = vmul.f32 %v437, %v279
    %v442 = vmul.f32 %v438, %v282
    %v443 = vmul.f32 %v439, %v287
    %v444 = vmul.f32 %v440, %v290
    %v445 = vld [vmem:[#allocation3] sm:$0xff]
    %v446 = vld [vmem:[#allocation3 + $0x8] sm:$0xff]
    %v447 = vld [vmem:[#allocation3 + $0x10] sm:$0xff]
    %v448 = vld [vmem:[#allocation3 + $0x18] sm:$0xff]
    %v449 = vpack.c.bf16 %v442, %v441
    %v450 = vpack.c.bf16 %v444, %v443
    %v451 = vld [vmem:[#allocation10] sm:$0xf]
    %v452 = vld [vmem:[#allocation10 + $0x4] sm:$0xf]
    %v453 = vld [vmem:[#allocation10 + $0x8] sm:$0xf]
    %v454 = vld [vmem:[#allocation10 + $0xc] sm:$0xf]
    %v455 = vld [vmem:[#allocation10 + $0x10] sm:$0xf]
    %v456 = vld [vmem:[#allocation10 + $0x14] sm:$0xf]
    %v457 = vld [vmem:[#allocation10 + $0x18] sm:$0xf]
    %v458 = vld [vmem:[#allocation10 + $0x1c] sm:$0xf]
    %v459 = vld [vmem:[#allocation10 + $0x20] sm:$0xf]
    %v460 = vld [vmem:[#allocation10 + $0x24] sm:$0xf]
    %v461 = vld [vmem:[#allocation10 + $0x28] sm:$0xf]
    %v462 = vld [vmem:[#allocation10 + $0x2c] sm:$0xf]
    %v463 = vld [vmem:[#allocation10 + $0x30] sm:$0xf]
    %v464 = vld [vmem:[#allocation10 + $0x34] sm:$0xf]
    %v465 = vld [vmem:[#allocation10 + $0x38] sm:$0xf]
    %v466 = vld [vmem:[#allocation10 + $0x3c] sm:$0xf]
    %v483 = vunpack.c.l.b16 %v451
    %v484 = vunpack.c.l.b16 %v452
    %v485 = vunpack.c.l.b16 %v453
    %v486 = vunpack.c.l.b16 %v454
    %v487 = vunpack.c.l.b16 %v455
    %v488 = vunpack.c.l.b16 %v456
    %v489 = vunpack.c.l.b16 %v457
    %v490 = vunpack.c.l.b16 %v458
    %v491 = vunpack.c.l.b16 %v459
    %v492 = vunpack.c.l.b16 %v460
    %v493 = vunpack.c.l.b16 %v461
    %v494 = vunpack.c.l.b16 %v462
    %v495 = vunpack.c.l.b16 %v463
    %v496 = vunpack.c.l.b16 %v464
    %v497 = vunpack.c.l.b16 %v465
    %v498 = vunpack.c.l.b16 %v466
    %v499 = vpack.c.b16 %v484, %v483
    %v500 = vpack.c.b16 %v486, %v485
    %v501 = vpack.c.b16 %v488, %v487
    %v502 = vpack.c.b16 %v490, %v489
    %v503 = vpack.c.b16 %v492, %v491
    %v504 = vpack.c.b16 %v494, %v493
    %v505 = vpack.c.b16 %v496, %v495
    %v506 = vpack.c.b16 %v498, %v497
    %515 = vmatprep.subr.bf16.mxu0 0
    %516 = vmatpush1.bf16.msra.mxu0 %v506
    %517 = vmatprep.subr.bf16.mxu0 0
    %518 = vmatpush1.bf16.msra.mxu0 %v505
    %519 = vmatprep.subr.bf16.mxu0 0
    %520 = vmatpush1.bf16.msra.mxu0 %v504
    %521 = vmatprep.subr.bf16.mxu0 0
    %522 = vmatpush1.bf16.msra.mxu0 %v503
    %523 = vmatprep.subr.bf16.mxu0 0
    %524 = vmatpush1.bf16.msra.mxu0 %v502
    %525 = vmatprep.subr.bf16.mxu0 0
    %526 = vmatpush1.bf16.msra.mxu0 %v501
    %527 = vmatprep.subr.bf16.mxu0 0
    %528 = vmatpush1.bf16.msra.mxu0 %v500
    %529 = vmatprep.subr.bf16.mxu0 0
    %530 = vmatpush1.bf16.msra.mxu0 %v499
    %531 = vmatprep.subr.bf16.mxu0 0
    %532 = vmatpush2.bf16.msra.mxu0 0
    %533 = vmatprep.subr.bf16.mxu0 0
    %534 = vmatpush2.bf16.msra.mxu0 0
    %535 = vmatprep.subr.bf16.mxu0 0
    %536 = vmatpush2.bf16.msra.mxu0 0
    %537 = vmatprep.subr.bf16.mxu0 0
    %538 = vmatpush2.bf16.msra.mxu0 0
    %539 = vmatprep.subr.bf16.mxu0 0
    %540 = vmatpush2.bf16.msra.mxu0 0
    %541 = vmatprep.subr.bf16.mxu0 0
    %542 = vmatpush2.bf16.msra.mxu0 0
    %543 = vmatprep.subr.bf16.mxu0 0
    %544 = vmatpush2.bf16.msra.mxu0 0
    %545 = vmatprep.subr.bf16.mxu0 0
    %546 = vmatpush2.bf16.msra.mxu0 0
    %547 = vmatprep.mubr.bf16.mxu0 0
    %548 = vmatmul.mubr.bf16.gmra.mxu0 %v449
    %v549 = vpop.f32.mrf.mxu0
    %v550 = vadd.f32 0.0, %v549
    %v551 = vpop.f32.mrf.mxu0
    %v552 = vpop.f32.mrf.mxu0
    %v553 = vadd.f32 0.0, %v552
    %v554 = vpop.f32.mrf.mxu0
    %555 = vmatprep.mubr.bf16.mxu0 0
    %556 = vmatmul.mubr.bf16.gmra.mxu0 %v450
    %v557 = vpop.f32.mrf.mxu0
    %v558 = vadd.f32 0.0, %v557
    %v559 = vpop.f32.mrf.mxu0
    %v560 = vpop.f32.mrf.mxu0
    %v561 = vadd.f32 0.0, %v560
    %v562 = vpop.f32.mrf.mxu0
    %563 = vdwg.mxu0
    %v564 = vadd.f32 %v445, %v550
    %v565 = vadd.f32 %v446, %v553
    %v566 = vadd.f32 %v447, %v558
    %v567 = vadd.f32 %v448, %v561
    %568 = vst [vmem:[#allocation3] sm:$0xff] %v564
    %569 = vst [vmem:[#allocation3 + $0x8] sm:$0xff] %v565
    %570 = vst [vmem:[#allocation3 + $0x10] sm:$0xff] %v566
    %571 = vst [vmem:[#allocation3 + $0x18] sm:$0xff] %v567
    // Predicated region
    $region54: #{tpu_custom_call.1} parent=1 // pred_check
      %p572 = pneg %p86
    $region55: #{tpu_custom_call.1} parent=1 // pred_check_branch
      %574 = sbr.rel (%p572) target = $region57
    $region56: #{tpu_custom_call.1} parent=1 // pred_region
      %v575 = vld [vmem:[#allocation3] sm:$0xff]
      %v576 = vld [vmem:[#allocation3 + $0x8] sm:$0xff]
      %v577 = vld [vmem:[#allocation3 + $0x10] sm:$0xff]
      %v578 = vld [vmem:[#allocation3 + $0x18] sm:$0xff]
      %v579 = vld [vmem:[%s7] sm:$0x1]
      %v581 = vlaneseq
      %v582 = vshrl.u32 %v581, 7
      %v583 = vsub.s32 0, %v582
      %v584 = vrot.slane %v579, %v583
      %v586 = vadd.f32 %v575, %v584
      %v587 = vadd.f32 %v576, %v584
      %v588 = vadd.f32 %v577, %v584
      %v589 = vadd.f32 %v578, %v584
      %590 = vst [vmem:[#allocation12] sm:$0xff] %v586
      %591 = vst [vmem:[#allocation12 + $0x8] sm:$0xff] %v587
      %592 = vst [vmem:[#allocation12 + $0x10] sm:$0xff] %v588
      %593 = vst [vmem:[#allocation12 + $0x18] sm:$0xff] %v589
    $region57: #{tpu_custom_call.1} parent=1 // pred_fallthru
      _
    // Predicated region
    $region58: #{tpu_custom_call.1} parent=1 // pred_check
      _
    $region59: #{tpu_custom_call.1} parent=1 // pred_check_branch
      %595 = sbr.rel (0) target = $region61
    $region60: #{tpu_custom_call.1} parent=1 // pred_region
      %s597 = ssub.s32 512, 512
      %598 = vsyncadd [#allocation6], %s597
      %s599 = sshll.u32 [#allocation12], 4
      %s600 = int_to_ptr.vmem [resolvable:$true] %s599
      %605 = dma.vmem_to_hbm [thread:$0]  %s600, 512, %s8, [#allocation6], 128, 128, 8
    $region61: #{tpu_custom_call.1} parent=1 // pred_fallthru
      _
    // Predicated region
    $region62: #{tpu_custom_call.1} parent=1 // pred_check
      _
    $region63: #{tpu_custom_call.1} parent=1 // pred_check_branch
      %607 = sbr.rel (0) target = $region65
    $region64: #{tpu_custom_call.1} parent=1 // pred_region
      %608 = dma.done [#allocation6], 512
    $region65: #{tpu_custom_call.1} parent=1 // pred_fallthru
      _
    %609 = vsyncpa [#allocation5], 1
    %610 = vsyncpa [#allocation8], 1
    %611 = vsyncpa [#allocation11], 1
    %612 = vsyncpa [#allocation6], 1

</llo_original>
